<compile_context>
chip_gen: v6e
topology: v6e:2x2x1
jax: 0.10.0
libtpu: 0.0.40
codegen_flags: <defaults>
</compile_context>

<pallas_src>
import jax
import jax.numpy as jnp
from jax import lax
from jax.experimental import pallas as pl
from jax.experimental.pallas import tpu as pltpu


# ---------------------------------------------------------------------------
# Tile helper
# ---------------------------------------------------------------------------
def _pick_tile(dim, candidates):
    # Largest evenly-dividing candidate; otherwise the full dim (a block dim
    # equal to the full array dim bypasses the (8,128) divisibility rule).
    for c in candidates:
        if dim >= c and dim % c == 0:
            return c
    return dim


# ---------------------------------------------------------------------------
# Generic fused (matmul + bias + activation) kernel: out = act(A @ B + bias)
# ---------------------------------------------------------------------------
def _make_fused_matmul_kernel(activation):
    def kernel(a_ref, b_ref, bias_ref, o_ref, acc_ref):
        @pl.when(pl.program_id(2) == 0)
        def _init():
            acc_ref[...] = jnp.zeros_like(acc_ref)

        acc_ref[...] += jnp.dot(
            a_ref[...], b_ref[...], preferred_element_type=jnp.float32
        )

        @pl.when(pl.program_id(2) == pl.num_programs(2) - 1)
        def _finalize():
            y = acc_ref[...] + bias_ref[...]          # (tm,tn) + (1,tn)
            if activation == "relu":
                y = jnp.maximum(y, 0.0)
            elif activation == "mean":                # MeanAct
                y = jnp.clip(jnp.exp(y), 1e-5, 1e6)
            elif activation == "disp":                # DispAct (stable softplus)
                sp = jnp.maximum(y, 0.0) + jnp.log1p(jnp.exp(-jnp.abs(y)))
                y = jnp.clip(sp, 1e-4, 1e4)
            elif activation == "pi":                  # Sigmoid
                y = 1.0 / (1.0 + jnp.exp(-y))
            o_ref[...] = y.astype(o_ref.dtype)

    return kernel


def fused_matmul(a, b, bias=None, activation="none"):
    """act(a @ b + bias) with bias/activation fused into the matmul epilogue."""
    M, K = a.shape
    K2, N = b.shape
    assert K == K2
    if bias is None:
        bias = jnp.zeros((1, N), dtype=jnp.float32)
    else:
        bias = jnp.reshape(bias, (1, N)).astype(jnp.float32)

    tm = _pick_tile(M, (256, 128, 64, 32, 16, 8))
    tn = _pick_tile(N, (512, 256, 128))
    tk = _pick_tile(K, (512, 256, 128))
    grid = (M // tm, N // tn, K // tk)

    n_trans = M * N if activation in ("mean", "disp", "pi") else 0
    cost = pl.CostEstimate(
        flops=2 * M * N * K,
        transcendentals=n_trans,
        bytes_accessed=(M * K + K * N + M * N + N) * 4,
    )

    return pl.pallas_call(
        _make_fused_matmul_kernel(activation),
        out_shape=jax.ShapeDtypeStruct((M, N), a.dtype),
        grid_spec=pltpu.PrefetchScalarGridSpec(
            num_scalar_prefetch=0,
            grid=grid,
            in_specs=[
                pl.BlockSpec((tm, tk), lambda i, j, k: (i, k)),
                pl.BlockSpec((tk, tn), lambda i, j, k: (k, j)),
                pl.BlockSpec((1, tn), lambda i, j, k: (0, j)),
            ],
            out_specs=pl.BlockSpec((tm, tn), lambda i, j, k: (i, j)),
            scratch_shapes=[pltpu.VMEM((tm, tn), jnp.float32)],
        ),
        compiler_params=pltpu.CompilerParams(
            dimension_semantics=("parallel", "parallel", "arbitrary"),
            vmem_limit_bytes=32 * 1024 * 1024,
        ),
        cost_estimate=cost,
    )(a, b, bias)


# ---------------------------------------------------------------------------
# Fused encoder stage-2: out = ReLU(GraphNorm(adj @ support + bias))
# Column-tiled over the hidden dim; full node dimension resident so the
# per-feature mean/var can be computed in the epilogue (no HBM round-trip).
# ---------------------------------------------------------------------------
def _gcn_gn_relu_kernel(adj_ref, s_ref, bias_ref, gamma_ref, beta_ref,
                        alpha_ref, o_ref, acc_ref):
    @pl.when(pl.program_id(1) == 0)
    def _init():
        acc_ref[...] = jnp.zeros_like(acc_ref)

    acc_ref[...] += jnp.dot(
        adj_ref[...], s_ref[...], preferred_element_type=jnp.float32
    )

    @pl.when(pl.program_id(1) == pl.num_programs(1) - 1)
    def _finalize():
        z = acc_ref[...] + bias_ref[...]                       # (M,tn)+(1,tn)
        mean = jnp.mean(z, axis=0, keepdims=True)
        zc = z - alpha_ref[...] * mean
        var = jnp.mean(zc * zc, axis=0, keepdims=True)
        y = zc * lax.rsqrt(var + 1e-5) * gamma_ref[...] + beta_ref[...]
        o_ref[...] = jnp.maximum(y, 0.0).astype(o_ref.dtype)


def gcn_graphnorm_relu(adj, support, bias, gamma, beta, alpha):
    M, K = adj.shape           # K == M (nodes)
    _, H = support.shape
    tn = _pick_tile(H, (512, 256, 128))
    tk = _pick_tile(K, (512, 256, 128))
    grid = (H // tn, K // tk)

    bias = jnp.reshape(bias, (1, H)).astype(jnp.float32)
    gamma = jnp.reshape(gamma, (1, H)).astype(jnp.float32)
    beta = jnp.reshape(beta, (1, H)).astype(jnp.float32)
    alpha = jnp.reshape(alpha, (1, H)).astype(jnp.float32)

    cost = pl.CostEstimate(
        flops=2 * M * H * K + 8 * M * H,
        transcendentals=H,
        bytes_accessed=(M * K + K * H + 2 * M * H + 4 * H) * 4,
    )

    return pl.pallas_call(
        _gcn_gn_relu_kernel,
        out_shape=jax.ShapeDtypeStruct((M, H), support.dtype),
        grid_spec=pltpu.PrefetchScalarGridSpec(
            num_scalar_prefetch=0,
            grid=grid,
            in_specs=[
                pl.BlockSpec((M, tk), lambda j, k: (0, k)),
                pl.BlockSpec((tk, tn), lambda j, k: (k, j)),
                pl.BlockSpec((1, tn), lambda j, k: (0, j)),
                pl.BlockSpec((1, tn), lambda j, k: (0, j)),
                pl.BlockSpec((1, tn), lambda j, k: (0, j)),
                pl.BlockSpec((1, tn), lambda j, k: (0, j)),
            ],
            out_specs=pl.BlockSpec((M, tn), lambda j, k: (0, j)),
            scratch_shapes=[pltpu.VMEM((M, tn), jnp.float32)],
        ),
        compiler_params=pltpu.CompilerParams(
            dimension_semantics=("parallel", "arbitrary"),
            vmem_limit_bytes=32 * 1024 * 1024,
        ),
        cost_estimate=cost,
    )(adj, support, bias, gamma, beta, alpha)


def _encoder_fused_fits(m, h, budget=24 * 1024 * 1024):
    tn = _pick_tile(h, (512, 256, 128))
    tk = _pick_tile(m, (512, 256, 128))
    # adj blocks (x2 buf) + support blocks (x2) + acc + out blocks (x2) + params
    need = (2 * m * tk + 2 * tk * tn + m * tn + 2 * m * tn + 8 * tn) * 4
    return need <= budget


# ---------------------------------------------------------------------------
# Standalone GraphNorm + ReLU (fallback path; column-tiled)
# ---------------------------------------------------------------------------
def _graphnorm_relu_kernel(x_ref, gamma_ref, beta_ref, alpha_ref, o_ref):
    x = x_ref[...].astype(jnp.float32)
    mean = jnp.mean(x, axis=0, keepdims=True)
    xc = x - alpha_ref[...] * mean
    var = jnp.mean(xc * xc, axis=0, keepdims=True)
    y = xc * lax.rsqrt(var + 1e-5) * gamma_ref[...] + beta_ref[...]
    o_ref[...] = jnp.maximum(y, 0.0).astype(o_ref.dtype)


def graphnorm_relu(x, gamma, beta, alpha):
    M, H = x.shape
    tn = _pick_tile(H, (512, 256, 128))
    return pl.pallas_call(
        _graphnorm_relu_kernel,
        out_shape=jax.ShapeDtypeStruct(x.shape, x.dtype),
        grid_spec=pltpu.PrefetchScalarGridSpec(
            num_scalar_prefetch=0,
            grid=(H // tn,),
            in_specs=[
                pl.BlockSpec((M, tn), lambda j: (0, j)),
                pl.BlockSpec((1, tn), lambda j: (0, j)),
                pl.BlockSpec((1, tn), lambda j: (0, j)),
                pl.BlockSpec((1, tn), lambda j: (0, j)),
            ],
            out_specs=pl.BlockSpec((M, tn), lambda j: (0, j)),
        ),
        compiler_params=pltpu.CompilerParams(
            dimension_semantics=("parallel",),
            vmem_limit_bytes=32 * 1024 * 1024,
        ),
    )(x, jnp.reshape(gamma, (1, H)), jnp.reshape(beta, (1, H)),
      jnp.reshape(alpha, (1, H)))


# ---------------------------------------------------------------------------
# Fused three-head decoder: reads ah = adj @ hidden once, produces
# MeanAct / DispAct / Sigmoid heads in a single pallas_call.
# ---------------------------------------------------------------------------
def _triple_head_kernel(a_ref, wm_ref, wd_ref, wp_ref, bm_ref, bd_ref, bp_ref,
                        om_ref, od_ref, op_ref, accm, accd, accp):
    @pl.when(pl.program_id(2) == 0)
    def _init():
        accm[...] = jnp.zeros_like(accm)
        accd[...] = jnp.zeros_like(accd)
        accp[...] = jnp.zeros_like(accp)

    a = a_ref[...]
    accm[...] += jnp.dot(a, wm_ref[...], preferred_element_type=jnp.float32)
    accd[...] += jnp.dot(a, wd_ref[...], preferred_element_type=jnp.float32)
    accp[...] += jnp.dot(a, wp_ref[...], preferred_element_type=jnp.float32)

    @pl.when(pl.program_id(2) == pl.num_programs(2) - 1)
    def _finalize():
        ym = accm[...] + bm_ref[...]
        om_ref[...] = jnp.clip(jnp.exp(ym), 1e-5, 1e6).astype(om_ref.dtype)

        yd = accd[...] + bd_ref[...]
        sp = jnp.maximum(yd, 0.0) + jnp.log1p(jnp.exp(-jnp.abs(yd)))
        od_ref[...] = jnp.clip(sp, 1e-4, 1e4).astype(od_ref.dtype)

        yp = accp[...] + bp_ref[...]
        op_ref[...] = (1.0 / (1.0 + jnp.exp(-yp))).astype(op_ref.dtype)


def fused_triple_head(ah, w_mean, b_mean, w_disp, b_disp, w_pi, b_pi):
    M, K = ah.shape
    _, N = w_mean.shape
    tm = _pick_tile(M, (256, 128, 64, 32, 16, 8))
    tn = _pick_tile(N, (512, 256, 128))
    tk = _pick_tile(K, (512, 256, 128))
    grid = (M // tm, N // tn, K // tk)

    b_mean = jnp.reshape(b_mean, (1, N)).astype(jnp.float32)
    b_disp = jnp.reshape(b_disp, (1, N)).astype(jnp.float32)
    b_pi = jnp.reshape(b_pi, (1, N)).astype(jnp.float32)

    cost = pl.CostEstimate(
        flops=3 * 2 * M * N * K,
        transcendentals=3 * M * N,
        bytes_accessed=(M * K + 3 * K * N + 3 * M * N + 3 * N) * 4,
    )

    wspec = pl.BlockSpec((tk, tn), lambda i, j, k: (k, j))
    bspec = pl.BlockSpec((1, tn), lambda i, j, k: (0, j))
    ospec = pl.BlockSpec((tm, tn), lambda i, j, k: (i, j))
    oshape = jax.ShapeDtypeStruct((M, N), ah.dtype)

    return pl.pallas_call(
        _triple_head_kernel,
        out_shape=(oshape, oshape, oshape),
        grid_spec=pltpu.PrefetchScalarGridSpec(
            num_scalar_prefetch=0,
            grid=grid,
            in_specs=[
                pl.BlockSpec((tm, tk), lambda i, j, k: (i, k)),
                wspec, wspec, wspec,
                bspec, bspec, bspec,
            ],
            out_specs=[ospec, ospec, ospec],
            scratch_shapes=[pltpu.VMEM((tm, tn), jnp.float32)] * 3,
        ),
        compiler_params=pltpu.CompilerParams(
            dimension_semantics=("parallel", "parallel", "arbitrary"),
            vmem_limit_bytes=32 * 1024 * 1024,
        ),
        cost_estimate=cost,
    )(ah, w_mean, w_disp, w_pi, b_mean, b_disp, b_pi)


# ---------------------------------------------------------------------------
# ZINBGAE forward
# ---------------------------------------------------------------------------
def zinbgae_forward(params, x, adj):
    # Encoder GCN: support = x @ W_share
    support = fused_matmul(x, params["W_share"])

    # z = adj @ support + b_share, GraphNorm, ReLU — fused in one kernel.
    n_nodes, hidden_dim = support.shape
    if _encoder_fused_fits(n_nodes, hidden_dim):
        hidden = gcn_graphnorm_relu(
            adj, support, params["b_share"],
            params["gn_gamma"], params["gn_beta"], params["gn_alpha"],
        )
    else:
        z = fused_matmul(adj, support, bias=params["b_share"])
        hidden = graphnorm_relu(
            z, params["gn_gamma"], params["gn_beta"], params["gn_alpha"]
        )
    # TODO(synk): Dropout(0.3) is eval-mode identity here; training mode would
    # use pltpu.prng_seed / pltpu.prng_random_bits inside the kernel.

    # Shared graph propagation for all three decoder heads:
    #   adj @ (hidden @ Wk) + bk  ==  ((adj @ hidden) @ Wk) + bk
    ah = fused_matmul(adj, hidden)

    # Single fused kernel for the three heads (bias + activations in epilogue).
    _mean, _disp, _pi = fused_triple_head(
        ah,
        params["W_mean"], params["b_mean"],
        params["W_disp"], params["b_disp"],
        params["W_pi"], params["b_pi"],
    )
    return _mean, _disp, _pi


# ---------------------------------------------------------------------------
# Pure-JAX reference (mirrors the PyTorch module semantics)
# ---------------------------------------------------------------------------
def ref_forward(params, x, adj):
    z = adj @ (x @ params["W_share"]) + params["b_share"]
    mean = z.mean(axis=0, keepdims=True)
    zc = z - params["gn_alpha"] * mean
    var = (zc * zc).mean(axis=0, keepdims=True)
    hidden = jnp.maximum(
        zc / jnp.sqrt(var + 1e-5) * params["gn_gamma"] + params["gn_beta"], 0.0
    )
    pm = adj @ (hidden @ params["W_mean"]) + params["b_mean"]
    pd = adj @ (hidden @ params["W_disp"]) + params["b_disp"]
    pp = adj @ (hidden @ params["W_pi"]) + params["b_pi"]
    _mean = jnp.clip(jnp.exp(pm), 1e-5, 1e6)
    _disp = jnp.clip(jax.nn.softplus(pd), 1e-4, 1e4)
    _pi = jax.nn.sigmoid(pp)
    return _mean, _disp, _pi


if __name__ == "__main__":
    key = jax.random.PRNGKey(0)
    ks = jax.random.split(key, 10)
    N_NODES, F_IN, HIDDEN = 64, 256, 32   # small graph; hidden_dim=32

    x = jax.random.normal(ks[0], (N_NODES, F_IN), dtype=jnp.float32)

    # Symmetric normalized adjacency: D^-1/2 (A + I) D^-1/2
    A = (jax.random.uniform(ks[1], (N_NODES, N_NODES)) < 0.1).astype(jnp.float32)
    A = jnp.maximum(A, A.T) + jnp.eye(N_NODES, dtype=jnp.float32)
    dinv = 1.0 / jnp.sqrt(A.sum(axis=1))
    adj = A * dinv[:, None] * dinv[None, :]

    def lin(k, fan_in, fan_out):
        return jax.random.normal(k, (fan_in, fan_out), jnp.float32) / jnp.sqrt(fan_in)

    params = {
        "W_share": lin(ks[2], F_IN, HIDDEN),
        "b_share": 0.01 * jax.random.normal(ks[3], (1, HIDDEN), jnp.float32),
        "gn_gamma": jnp.ones((1, HIDDEN), jnp.float32),
        "gn_beta": jnp.zeros((1, HIDDEN), jnp.float32),
        "gn_alpha": jnp.ones((1, HIDDEN), jnp.float32),
        "W_mean": lin(ks[4], HIDDEN, F_IN),
        "b_mean": 0.01 * jax.random.normal(ks[5], (1, F_IN), jnp.float32),
        "W_disp": lin(ks[6], HIDDEN, F_IN),
        "b_disp": 0.01 * jax.random.normal(ks[7], (1, F_IN), jnp.float32),
        "W_pi": lin(ks[8], HIDDEN, F_IN),
        "b_pi": 0.01 * jax.random.normal(ks[9], (1, F_IN), jnp.float32),
    }

    outs = zinbgae_forward(params, x, adj)
    jax.block_until_ready(outs)

    refs = ref_forward(params, x, adj)
    for o, r, name in zip(outs, refs, ("mean", "disp", "pi")):
        assert o.shape == r.shape and o.dtype == r.dtype, name
        assert jnp.allclose(o, r, rtol=1e-4, atol=1e-4), name

    print("KERNEL_OK")
</pallas_src>

<mosaic_0001>
module attributes {stable_mosaic.version = 11 : i64} {
  func.func @kernel(%arg0: i32, %arg1: i32, %arg2: i32, %arg3: memref<64x256xf32, #tpu.memory_space<vmem>>, %arg4: memref<256x32xf32, #tpu.memory_space<vmem>>, %arg5: memref<1x32xf32, #tpu.memory_space<vmem>>, %arg6: memref<64x32xf32, #tpu.memory_space<vmem>>, %arg7: memref<64x32xf32, #tpu.memory_space<vmem>>) attributes {dimension_semantics = [#tpu.dimension_semantics<parallel>, #tpu.dimension_semantics<parallel>, #tpu.dimension_semantics<arbitrary>], iteration_bounds = array<i64: 1, 1, 1>, scalar_prefetch = 0 : i64, scratch_operands = 1 : i64, tpu.core_type = #tpu.core_type<tc>, window_params = [{transform_indices = @transform_0, window_bounds = array<i64: 64, 256>}, {transform_indices = @transform_1, window_bounds = array<i64: 256, 32>}, {transform_indices = @transform_2, window_bounds = array<i64: 1, 32>}, {transform_indices = @transform_3, window_bounds = array<i64: 64, 32>}]} {
    %c0_i32 = arith.constant 0 : i32
    %0 = arith.cmpi eq, %arg2, %c0_i32 : i32
    %1 = arith.extui %0 : i1 to i32
    %c0_i32_0 = arith.constant 0 : i32
    %2 = arith.cmpi ne, %1, %c0_i32_0 : i32
    scf.if %2 {
      %cst_10 = arith.constant 0.000000e+00 : f32
      %12 = vector.broadcast %cst_10 : f32 to vector<64x32xf32>
      %c0_11 = arith.constant 0 : index
      %c0_12 = arith.constant 0 : index
      %13 = vector.load %arg7[%c0_11, %c0_12] : memref<64x32xf32, #tpu.memory_space<vmem>>, vector<64x32xf32>
      tpu.vector_store %arg7[%c0_11, %c0_12], %12 {strides = array<i32>} : memref<64x32xf32, #tpu.memory_space<vmem>>, vector<64x32xf32>,
    } else {
    }
    %c0 = arith.constant 0 : index
    %c0_1 = arith.constant 0 : index
    %3 = vector.load %arg7[%c0, %c0_1] : memref<64x32xf32, #tpu.memory_space<vmem>>, vector<64x32xf32>
    %c0_2 = arith.constant 0 : index
    %c0_3 = arith.constant 0 : index
    %4 = vector.load %arg3[%c0_2, %c0_3] : memref<64x256xf32, #tpu.memory_space<vmem>>, vector<64x256xf32>
    %c0_4 = arith.constant 0 : index
    %c0_5 = arith.constant 0 : index
    %5 = vector.load %arg4[%c0_4, %c0_5] : memref<256x32xf32, #tpu.memory_space<vmem>>, vector<256x32xf32>
    %cst = arith.constant dense<0.000000e+00> : vector<64x32xf32>
    %6 = tpu.matmul %4, %5, %cst {dimension_numbers = #tpu.dot_dimension_numbers<[1], [0], [0], [1], [0, 0, 1, 1], [], []>} : vector<64x256xf32>, vector<256x32xf32>, vector<64x32xf32> -> vector<64x32xf32>
    %7 = arith.addf %3, %6 : vector<64x32xf32>
    %c0_6 = arith.constant 0 : index
    %c0_7 = arith.constant 0 : index
    %8 = vector.load %arg7[%c0_6, %c0_7] : memref<64x32xf32, #tpu.memory_space<vmem>>, vector<64x32xf32>
    tpu.vector_store %arg7[%c0_6, %c0_7], %7 {strides = array<i32>} : memref<64x32xf32, #tpu.memory_space<vmem>>, vector<64x32xf32>,
    %c0_i32_8 = arith.constant 0 : i32
    %9 = arith.cmpi eq, %arg2, %c0_i32_8 : i32
    %10 = arith.extui %9 : i1 to i32
    %c0_i32_9 = arith.constant 0 : i32
    %11 = arith.cmpi ne, %10, %c0_i32_9 : i32
    scf.if %11 {
      %c0_10 = arith.constant 0 : index
      %c0_11 = arith.constant 0 : index
      %12 = vector.load %arg7[%c0_10, %c0_11] : memref<64x32xf32, #tpu.memory_space<vmem>>, vector<64x32xf32>
      %c0_12 = arith.constant 0 : index
      %c0_13 = arith.constant 0 : index
      %13 = vector.load %arg5[%c0_12, %c0_13] : memref<1x32xf32, #tpu.memory_space<vmem>>, vector<1x32xf32>
      %14 = vector.broadcast %13 : vector<1x32xf32> to vector<64x32xf32>
      %15 = arith.addf %12, %14 : vector<64x32xf32>
      %c0_14 = arith.constant 0 : index
      %c0_15 = arith.constant 0 : index
      %16 = vector.load %arg6[%c0_14, %c0_15] : memref<64x32xf32, #tpu.memory_space<vmem>>, vector<64x32xf32>
      tpu.vector_store %arg6[%c0_14, %c0_15], %15 {strides = array<i32>} : memref<64x32xf32, #tpu.memory_space<vmem>>, vector<64x32xf32>,
    } else {
    }
    return
  }
  func.func @transform_0(%arg0: i32, %arg1: i32, %arg2: i32) -> (i32, i32) {
    %c0_i32 = arith.constant 0 : i32
    return %arg0, %arg2 : i32, i32
  }
  func.func @transform_1(%arg0: i32, %arg1: i32, %arg2: i32) -> (i32, i32) {
    %c0_i32 = arith.constant 0 : i32
    return %arg2, %arg1 : i32, i32
  }
  func.func @transform_2(%arg0: i32, %arg1: i32, %arg2: i32) -> (i32, i32) {
    %c0_i32 = arith.constant 0 : i32
    %c0_i32_0 = arith.constant 0 : i32
    return %c0_i32, %arg1 : i32, i32
  }
  func.func @transform_3(%arg0: i32, %arg1: i32, %arg2: i32) -> (i32, i32) {
    %c0_i32 = arith.constant 0 : i32
    return %arg0, %arg1 : i32, i32
  }
}

</mosaic_0001>

<llo_original>
// kernel: tpu_custom_call.1
$region0: #{tpu_custom_call.1}
  #allocation0 [shape = 'u32[]', space=smem, size = 0x4, offset = 0x4, fixed_abs, tag = 'smem constant byte address 0x4 - core index']
  #allocation1 [shape = 'u32[144,128]{1,0:T(1,128)}', space=vmem, size = 0x12000, scoped, tag = 'internal scratch']
  #allocation2 [shape = 'f32[64,32]{1,0:T(8,128)}', space=vmem, size = 0x8000, scoped, tag = 'scratch operand']
  %s0 = inlined_call_operand.vmem [shape: f32[64,256], index: 0, kind: input, shape index: {}]
  %s1 = inlined_call_operand.vmem [shape: f32[256,32], index: 1, kind: input, shape index: {}]
  %s2 = inlined_call_operand.vmem [shape: f32[1,32], index: 2, kind: input, shape index: {}]
  %s3 = inlined_call_operand.vmem [shape: f32[64,32], index: 3, kind: output, shape index: {}]
  %s4 = sld [smem:[#allocation0]]
  $region30: #{tpu_custom_call.1} parent=0
    _
  %s6 = ssub.s32 1, %s4
  %s7 = scalar_select 0, %s6, %s4
  // Predicated region
  $region2: #{tpu_custom_call.1} parent=0 // pred_check
    _
  $region3: #{tpu_custom_call.1} parent=0 // pred_check_branch
    %9 = sbr.rel (0) target = $region5
  $region4: #{tpu_custom_call.1} parent=0 // pred_region
    _
  $region5: #{tpu_custom_call.1} parent=0 // pred_fallthru
    _
  // Predicated region
  $region6: #{tpu_custom_call.1} parent=0 // pred_check
    _
  $region7: #{tpu_custom_call.1} parent=0 // pred_check_branch
    %11 = sbr.rel (0) target = $region9
  $region8: #{tpu_custom_call.1} parent=0 // pred_region
    _
  $region9: #{tpu_custom_call.1} parent=0 // pred_fallthru
    _
  // Predicated region
  $region10: #{tpu_custom_call.1} parent=0 // pred_check
    _
  $region11: #{tpu_custom_call.1} parent=0 // pred_check_branch
    %13 = sbr.rel (0) target = $region13
  $region12: #{tpu_custom_call.1} parent=0 // pred_region
    _
  $region13: #{tpu_custom_call.1} parent=0 // pred_fallthru
    _
  %p14 = scmp.eq.s32.totalorder 0, 0
  // Predicated region
  $region14: #{tpu_custom_call.1} parent=0 // pred_check
    %p15 = pneg %p14
  $region15: #{tpu_custom_call.1} parent=0 // pred_check_branch
    %17 = sbr.rel (%p15) target = $region17
  $region16: #{tpu_custom_call.1} parent=0 // pred_region
    %vm18 = vcmask 261120
    %19 = vst.msk [vmem:[#allocation2] sm:$0xff] %vm18, 0.0
    %20 = vst.msk [vmem:[#allocation2 + $0x8] sm:$0xff] %vm18, 0.0
    %21 = vst.msk [vmem:[#allocation2 + $0x10] sm:$0xff] %vm18, 0.0
    %22 = vst.msk [vmem:[#allocation2 + $0x18] sm:$0xff] %vm18, 0.0
    %23 = vst.msk [vmem:[#allocation2 + $0x20] sm:$0xff] %vm18, 0.0
    %24 = vst.msk [vmem:[#allocation2 + $0x28] sm:$0xff] %vm18, 0.0
    %25 = vst.msk [vmem:[#allocation2 + $0x30] sm:$0xff] %vm18, 0.0
    %26 = vst.msk [vmem:[#allocation2 + $0x38] sm:$0xff] %vm18, 0.0
  $region17: #{tpu_custom_call.1} parent=0 // pred_fallthru
    _
  %v27 = vld [vmem:[#allocation2] sm:$0xff]
  %v28 = vld [vmem:[#allocation2 + $0x8] sm:$0xff]
  %v29 = vld [vmem:[#allocation2 + $0x10] sm:$0xff]
  %v30 = vld [vmem:[#allocation2 + $0x18] sm:$0xff]
  %v31 = vld [vmem:[#allocation2 + $0x20] sm:$0xff]
  %v32 = vld [vmem:[#allocation2 + $0x28] sm:$0xff]
  %v33 = vld [vmem:[#allocation2 + $0x30] sm:$0xff]
  %v34 = vld [vmem:[#allocation2 + $0x38] sm:$0xff]
  %v35 = vld [vmem:[%s0] sm:$0xff]
  %v36 = vld [vmem:[%s0 + $0x8] sm:$0xff]
  %v37 = vld [vmem:[%s0 + $0x10] sm:$0xff]
  %v38 = vld [vmem:[%s0 + $0x18] sm:$0xff]
  %v39 = vld [vmem:[%s0 + $0x20] sm:$0xff]
  %v40 = vld [vmem:[%s0 + $0x28] sm:$0xff]
  %v41 = vld [vmem:[%s0 + $0x30] sm:$0xff]
  %v42 = vld [vmem:[%s0 + $0x38] sm:$0xff]
  %v43 = vld [vmem:[%s0 + $0x40] sm:$0xff]
  %v44 = vld [vmem:[%s0 + $0x48] sm:$0xff]
  %v45 = vld [vmem:[%s0 + $0x50] sm:$0xff]
  %v46 = vld [vmem:[%s0 + $0x58] sm:$0xff]
  %v47 = vld [vmem:[%s0 + $0x60] sm:$0xff]
  %v48 = vld [vmem:[%s0 + $0x68] sm:$0xff]
  %v49 = vld [vmem:[%s0 + $0x70] sm:$0xff]
  %v50 = vld [vmem:[%s0 + $0x78] sm:$0xff]
  %v51 = vld [vmem:[%s1] sm:$0xff]
  %v52 = vld [vmem:[%s1 + $0x8] sm:$0xff]
  %v53 = vld [vmem:[%s1 + $0x10] sm:$0xff]
  %v54 = vld [vmem:[%s1 + $0x18] sm:$0xff]
  %v55 = vld [vmem:[%s1 + $0x20] sm:$0xff]
  %v56 = vld [vmem:[%s1 + $0x28] sm:$0xff]
  %v57 = vld [vmem:[%s1 + $0x30] sm:$0xff]
  %v58 = vld [vmem:[%s1 + $0x38] sm:$0xff]
  %v59 = vld [vmem:[%s1 + $0x40] sm:$0xff]
  %v60 = vld [vmem:[%s1 + $0x48] sm:$0xff]
  %v61 = vld [vmem:[%s1 + $0x50] sm:$0xff]
  %v62 = vld [vmem:[%s1 + $0x58] sm:$0xff]
  %v63 = vld [vmem:[%s1 + $0x60] sm:$0xff]
  %v64 = vld [vmem:[%s1 + $0x68] sm:$0xff]
  %v65 = vld [vmem:[%s1 + $0x70] sm:$0xff]
  %v66 = vld [vmem:[%s1 + $0x78] sm:$0xff]
  %v67 = vld [vmem:[%s1 + $0x80] sm:$0xff]
  %v68 = vld [vmem:[%s1 + $0x88] sm:$0xff]
  %v69 = vld [vmem:[%s1 + $0x90] sm:$0xff]
  %v70 = vld [vmem:[%s1 + $0x98] sm:$0xff]
  %v71 = vld [vmem:[%s1 + $0xa0] sm:$0xff]
  %v72 = vld [vmem:[%s1 + $0xa8] sm:$0xff]
  %v73 = vld [vmem:[%s1 + $0xb0] sm:$0xff]
  %v74 = vld [vmem:[%s1 + $0xb8] sm:$0xff]
  %v75 = vld [vmem:[%s1 + $0xc0] sm:$0xff]
  %v76 = vld [vmem:[%s1 + $0xc8] sm:$0xff]
  %v77 = vld [vmem:[%s1 + $0xd0] sm:$0xff]
  %v78 = vld [vmem:[%s1 + $0xd8] sm:$0xff]
  %v79 = vld [vmem:[%s1 + $0xe0] sm:$0xff]
  %v80 = vld [vmem:[%s1 + $0xe8] sm:$0xff]
  %v81 = vld [vmem:[%s1 + $0xf0] sm:$0xff]
  %v82 = vld [vmem:[%s1 + $0xf8] sm:$0xff]
  %83 = vmatprep.subr.mxu0 0.0
  %84 = vmatpush1.msra.mxu0 %v66
  %85 = vmatprep.subr.mxu0 0.0
  %86 = vmatpush1.msra.mxu0 %v65
  %87 = vmatprep.subr.mxu0 0.0
  %88 = vmatpush1.msra.mxu0 %v64
  %89 = vmatprep.subr.mxu0 0.0
  %90 = vmatpush1.msra.mxu0 %v63
  %91 = vmatprep.subr.mxu0 0.0
  %92 = vmatpush1.msra.mxu0 %v62
  %93 = vmatprep.subr.mxu0 0.0
  %94 = vmatpush1.msra.mxu0 %v61
  %95 = vmatprep.subr.mxu0 0.0
  %96 = vmatpush1.msra.mxu0 %v60
  %97 = vmatprep.subr.mxu0 0.0
  %98 = vmatpush1.msra.mxu0 %v59
  %99 = vmatprep.subr.mxu0 0.0
  %100 = vmatpush1.msra.mxu0 %v58
  %101 = vmatprep.subr.mxu0 0.0
  %102 = vmatpush1.msra.mxu0 %v57
  %103 = vmatprep.subr.mxu0 0.0
  %104 = vmatpush1.msra.mxu0 %v56
  %105 = vmatprep.subr.mxu0 0.0
  %106 = vmatpush1.msra.mxu0 %v55
  %107 = vmatprep.subr.mxu0 0.0
  %108 = vmatpush1.msra.mxu0 %v54
  %109 = vmatprep.subr.mxu0 0.0
  %110 = vmatpush1.msra.mxu0 %v53
  %111 = vmatprep.subr.mxu0 0.0
  %112 = vmatpush1.msra.mxu0 %v52
  %113 = vmatprep.subr.mxu0 0.0
  %114 = vmatpush1.msra.mxu0 %v51
  %115 = vmatprep.subr.mxu0 0.0
  %116 = vmatpush2.msra.mxu0 %v82
  %117 = vmatprep.subr.mxu0 0.0
  %118 = vmatpush2.msra.mxu0 %v81
  %119 = vmatprep.subr.mxu0 0.0
  %120 = vmatpush2.msra.mxu0 %v80
  %121 = vmatprep.subr.mxu0 0.0
  %122 = vmatpush2.msra.mxu0 %v79
  %123 = vmatprep.subr.mxu0 0.0
  %124 = vmatpush2.msra.mxu0 %v78
  %125 = vmatprep.subr.mxu0 0.0
  %126 = vmatpush2.msra.mxu0 %v77
  %127 = vmatprep.subr.mxu0 0.0
  %128 = vmatpush2.msra.mxu0 %v76
  %129 = vmatprep.subr.mxu0 0.0
  %130 = vmatpush2.msra.mxu0 %v75
  %131 = vmatprep.subr.mxu0 0.0
  %132 = vmatpush2.msra.mxu0 %v74
  %133 = vmatprep.subr.mxu0 0.0
  %134 = vmatpush2.msra.mxu0 %v73
  %135 = vmatprep.subr.mxu0 0.0
  %136 = vmatpush2.msra.mxu0 %v72
  %137 = vmatprep.subr.mxu0 0.0
  %138 = vmatpush2.msra.mxu0 %v71
  %139 = vmatprep.subr.mxu0 0.0
  %140 = vmatpush2.msra.mxu0 %v70
  %141 = vmatprep.subr.mxu0 0.0
  %142 = vmatpush2.msra.mxu0 %v69
  %143 = vmatprep.subr.mxu0 0.0
  %144 = vmatpush2.msra.mxu0 %v68
  %145 = vmatprep.subr.mxu0 0.0
  %146 = vmatpush2.msra.mxu0 %v67
  %147 = vmatprep.mubr.f32.mxu0 %v36
  %148 = vmatmul.mubr.f32.gmra.mxu0 %v35
  %v149 = vpop.f32.mrf.mxu0
  %v150 = vadd.f32 0.0, %v149
  %v151 = vpop.f32.mrf.mxu0
  %152 = vmatprep.mubr.f32.mxu0 %v38
  %153 = vmatmul.mubr.f32.gmra.mxu0 %v37
  %v154 = vpop.f32.mrf.mxu0
  %v155 = vadd.f32 0.0, %v154
  %v156 = vpop.f32.mrf.mxu0
  %157 = vmatprep.mubr.f32.mxu0 %v40
  %158 = vmatmul.mubr.f32.gmra.mxu0 %v39
  %v159 = vpop.f32.mrf.mxu0
  %v160 = vadd.f32 0.0, %v159
  %v161 = vpop.f32.mrf.mxu0
  %162 = vmatprep.mubr.f32.mxu0 %v42
  %163 = vmatmul.mubr.f32.gmra.mxu0 %v41
  %v164 = vpop.f32.mrf.mxu0
  %v165 = vadd.f32 0.0, %v164
  %v166 = vpop.f32.mrf.mxu0
  %167 = vmatprep.mubr.f32.mxu0 %v44
  %168 = vmatmul.mubr.f32.gmra.mxu0 %v43
  %v169 = vpop.f32.mrf.mxu0
  %v170 = vadd.f32 0.0, %v169
  %v171 = vpop.f32.mrf.mxu0
  %172 = vmatprep.mubr.f32.mxu0 %v46
  %173 = vmatmul.mubr.f32.gmra.mxu0 %v45
  %v174 = vpop.f32.mrf.mxu0
  %v175 = vadd.f32 0.0, %v174
  %v176 = vpop.f32.mrf.mxu0
  %177 = vmatprep.mubr.f32.mxu0 %v48
  %178 = vmatmul.mubr.f32.gmra.mxu0 %v47
  %v179 = vpop.f32.mrf.mxu0
  %v180 = vadd.f32 0.0, %v179
  %v181 = vpop.f32.mrf.mxu0
  %182 = vmatprep.mubr.f32.mxu0 %v50
  %183 = vmatmul.mubr.f32.gmra.mxu0 %v49
  %v184 = vpop.f32.mrf.mxu0
  %v185 = vadd.f32 0.0, %v184
  %v186 = vpop.f32.mrf.mxu0
  %187 = vdwg.mxu0
  %v188 = vadd.f32 %v27, %v150
  %v189 = vadd.f32 %v28, %v155
  %v190 = vadd.f32 %v29, %v160
  %v191 = vadd.f32 %v30, %v165
  %v192 = vadd.f32 %v31, %v170
  %v193 = vadd.f32 %v32, %v175
  %v194 = vadd.f32 %v33, %v180
  %v195 = vadd.f32 %v34, %v185
  %vm196 = vcmask 261120
  %197 = vst.msk [vmem:[#allocation2] sm:$0xff] %vm196, %v188
  %198 = vst.msk [vmem:[#allocation2 + $0x8] sm:$0xff] %vm196, %v189
  %199 = vst.msk [vmem:[#allocation2 + $0x10] sm:$0xff] %vm196, %v190
  %200 = vst.msk [vmem:[#allocation2 + $0x18] sm:$0xff] %vm196, %v191
  %201 = vst.msk [vmem:[#allocation2 + $0x20] sm:$0xff] %vm196, %v192
  %202 = vst.msk [vmem:[#allocation2 + $0x28] sm:$0xff] %vm196, %v193
  %203 = vst.msk [vmem:[#allocation2 + $0x30] sm:$0xff] %vm196, %v194
  %204 = vst.msk [vmem:[#allocation2 + $0x38] sm:$0xff] %vm196, %v195
  // Predicated region
  $region18: #{tpu_custom_call.1} parent=0 // pred_check
    %p205 = pneg %p14
  $region19: #{tpu_custom_call.1} parent=0 // pred_check_branch
    %207 = sbr.rel (%p205) target = $region21
  $region20: #{tpu_custom_call.1} parent=0 // pred_region
    %v208 = vld [vmem:[#allocation2] sm:$0xff]
    %v209 = vld [vmem:[#allocation2 + $0x8] sm:$0xff]
    %v210 = vld [vmem:[#allocation2 + $0x10] sm:$0xff]
    %v211 = vld [vmem:[#allocation2 + $0x18] sm:$0xff]
    %v212 = vld [vmem:[#allocation2 + $0x20] sm:$0xff]
    %v213 = vld [vmem:[#allocation2 + $0x28] sm:$0xff]
    %v214 = vld [vmem:[#allocation2 + $0x30] sm:$0xff]
    %v215 = vld [vmem:[#allocation2 + $0x38] sm:$0xff]
    %v216 = vld [vmem:[%s2] sm:$0x1]
    %v218 = vlaneseq
    %v219 = vshrl.u32 %v218, 7
    %v220 = vsub.s32 0, %v219
    %v221 = vrot.slane %v216, %v220
    %v223 = vadd.f32 %v208, %v221
    %v224 = vadd.f32 %v209, %v221
    %v225 = vadd.f32 %v210, %v221
    %v226 = vadd.f32 %v211, %v221
    %v227 = vadd.f32 %v212, %v221
    %v228 = vadd.f32 %v213, %v221
    %v229 = vadd.f32 %v214, %v221
    %v230 = vadd.f32 %v215, %v221
    %231 = vst.msk [vmem:[%s3] sm:$0xff] %vm196, %v223
    %232 = vst.msk [vmem:[%s3 + $0x8] sm:$0xff] %vm196, %v224
    %233 = vst.msk [vmem:[%s3 + $0x10] sm:$0xff] %vm196, %v225
    %234 = vst.msk [vmem:[%s3 + $0x18] sm:$0xff] %vm196, %v226
    %235 = vst.msk [vmem:[%s3 + $0x20] sm:$0xff] %vm196, %v227
    %236 = vst.msk [vmem:[%s3 + $0x28] sm:$0xff] %vm196, %v228
    %237 = vst.msk [vmem:[%s3 + $0x30] sm:$0xff] %vm196, %v229
    %238 = vst.msk [vmem:[%s3 + $0x38] sm:$0xff] %vm196, %v230
  $region21: #{tpu_custom_call.1} parent=0 // pred_fallthru
    _
  // Predicated region
  $region22: #{tpu_custom_call.1} parent=0 // pred_check
    _
  $region23: #{tpu_custom_call.1} parent=0 // pred_check_branch
    %240 = sbr.rel (0) target = $region25
  $region24: #{tpu_custom_call.1} parent=0 // pred_region
    _
  $region25: #{tpu_custom_call.1} parent=0 // pred_fallthru
    _
  // Predicated region
  $region26: #{tpu_custom_call.1} parent=0 // pred_check
    _
  $region27: #{tpu_custom_call.1} parent=0 // pred_check_branch
    %242 = sbr.rel (0) target = $region29
  $region28: #{tpu_custom_call.1} parent=0 // pred_region
    _
  $region29: #{tpu_custom_call.1} parent=0 // pred_fallthru
    _

</llo_original>
